<compile_context>
chip_gen: v5e
topology: v5e:2x2
jax: 0.10.0
libtpu: 0.0.40
codegen_flags: <defaults>
</compile_context>

<pallas_src>
import functools

import jax
import jax.numpy as jnp
from jax import lax
from jax.experimental import pallas as pl
from jax.experimental.pallas import tpu as pltpu


def _round_up(n, m):
    return ((n + m - 1) // m) * m


def _pick_block_b(B, D0, D1, D2, DG, requested, in_itemsize):
    """Batch tile: multiple of 8 sublanes, sized so double-buffered per-tile traffic
    stays well under the default scoped-VMEM limit on every TPU generation
    (v7x: 64 MiB physical / 32 MiB default scoped -> budget ~16 MiB)."""
    if requested is None:
        per_row = 2 * (D0 * in_itemsize + (D1 + D2 + DG) * 4)  # double-buffered tiles
        tb = (16 * 1024 * 1024) // max(per_row, 1)
        tb = max(8, min(512, (tb // 8) * 8))
    else:
        tb = max(8, (int(requested) // 8) * 8)
    return min(tb, _round_up(B, 8))


# --------------------------------------------------------------------------------
# Kernels
# --------------------------------------------------------------------------------
def _cld_kernel(x_ref, wn_ref, cld_ref):
    # CLD = row_l2_normalize(x @ Wn).  The x row-normalization of NormedLinear is a
    # per-row positive scalar that cancels in the final normalization, so it is
    # omitted (bit-equivalent except the all-zero-row case, which NaNs in both).
    cld = jnp.dot(x_ref[...], wn_ref[...], preferred_element_type=jnp.float32)
    inv = lax.rsqrt(jnp.sum(cld * cld, axis=1, keepdims=True))  # no eps (matches torch)
    cld_ref[...] = (cld * inv).astype(cld_ref.dtype)


def _make_pass1_kernel(tb, b_actual):
    """Linear(D0->D1) + per-tile BN sufficient statistics + CLD branch."""

    def kernel(x_ref, w1_ref, b1_ref, wn_ref, h_ref, sum_ref, ssq_ref, cld_ref):
        x = x_ref[...]                                           # (TB, D0), matmul dtype

        # ---- predictor Linear(D0 -> D1), f32 accumulation on the MXU ----
        h = jnp.dot(x, w1_ref[...], preferred_element_type=jnp.float32) + b1_ref[...]
        h_ref[...] = h                                           # f32 intermediate

        # ---- BatchNorm sufficient statistics for this tile (mask padded rows) ----
        row = pl.program_id(0) * tb + lax.broadcasted_iota(jnp.int32, (tb, 1), 0)
        valid = (row < b_actual).astype(jnp.float32)             # (TB, 1)
        hm = h * valid
        s = jnp.sum(hm, axis=0, keepdims=True)                   # (1, D1)  sum h
        q = jnp.sum(hm * h, axis=0, keepdims=True)               # (1, D1)  sum h^2
        sum_ref[...] = s[None]                                   # (1, 1, D1)
        ssq_ref[...] = q[None]

        # ---- CLD branch ----
        cld = jnp.dot(x, wn_ref[...], preferred_element_type=jnp.float32)
        inv = lax.rsqrt(jnp.sum(cld * cld, axis=1, keepdims=True))
        cld_ref[...] = (cld * inv).astype(cld_ref.dtype)

    return kernel


def _make_pass2_kernel(matmul_dtype):
    """BN-apply (folded scale/shift) + ReLU + Linear(D1 -> D2)."""

    def kernel(h_ref, scale_ref, shift_ref, w2_ref, b2_ref, pred_ref):
        a = jnp.maximum(h_ref[...] * scale_ref[...] + shift_ref[...], 0.0)  # f32
        a = a.astype(matmul_dtype)
        pred = jnp.dot(a, w2_ref[...], preferred_element_type=jnp.float32) + b2_ref[...]
        pred_ref[...] = pred.astype(pred_ref.dtype)

    return kernel


# --------------------------------------------------------------------------------
# Wrapper
# --------------------------------------------------------------------------------
def pred_and_cld(x, params, online=True, *, block_b=None, matmul_dtype=jnp.bfloat16):
    """Forward pass of PredAndCLD.

    x: (B, D0) float32. params: dict from init_params (linear weights stored as
    (in, out), i.e. torch W.T). Returns (pred, CLD) if online else CLD.
    """
    B, D0 = x.shape
    D1 = params["w1"].shape[1]
    D2 = params["w2"].shape[1]
    DG = params["wg"].shape[1]
    f32 = jnp.float32

    # x-independent: column-normalize the NormedLinear weight (hoisted out of kernel).
    wg = params["wg"].astype(f32)
    col = jnp.sqrt(jnp.sum(wg * wg, axis=0, keepdims=True))
    wn = (wg / jnp.maximum(col, 1e-12)).astype(matmul_dtype)

    TB = _pick_block_b(B, D0, D1, D2, DG, block_b, jnp.dtype(matmul_dtype).itemsize)
    Bp = _round_up(B, TB)
    nbt = pl.cdiv(Bp, TB)

    xm = x.astype(matmul_dtype)
    if Bp != B:
        xm = jnp.pad(xm, ((0, Bp - B), (0, 0)))  # padded rows are masked / sliced off

    def resident(shape):
        return pl.BlockSpec(shape, lambda i: (0,) * len(shape))

    x_spec = pl.BlockSpec((TB, D0), lambda i: (i, 0))
    cld_spec = pl.BlockSpec((TB, DG), lambda i: (i, 0))
    cparams = pltpu.CompilerParams(dimension_semantics=("parallel",))

    # ------------------------------- online=False -------------------------------
    if not online:
        cld = pl.pallas_call(
            _cld_kernel,
            grid=(nbt,),
            in_specs=[x_spec, resident((D0, DG))],
            out_specs=cld_spec,
            out_shape=jax.ShapeDtypeStruct((Bp, DG), f32),
            compiler_params=cparams,
        )(xm, wn)
        return cld[:B]

    # ------------------------------- online=True --------------------------------
    w1 = params["w1"].astype(matmul_dtype)
    b1 = params["b1"].reshape(1, D1).astype(f32)

    h, hsum, hssq, cld = pl.pallas_call(
        _make_pass1_kernel(TB, B),
        grid=(nbt,),
        in_specs=[x_spec, resident((D0, D1)), resident((1, D1)), resident((D0, DG))],
        out_specs=(
            pl.BlockSpec((TB, D1), lambda i: (i, 0)),
            pl.BlockSpec((1, 1, D1), lambda i: (i, 0, 0)),
            pl.BlockSpec((1, 1, D1), lambda i: (i, 0, 0)),
            cld_spec,
        ),
        out_shape=(
            jax.ShapeDtypeStruct((Bp, D1), f32),       # h intermediate (f32)
            jax.ShapeDtypeStruct((nbt, 1, D1), f32),   # per-tile sum(h)
            jax.ShapeDtypeStruct((nbt, 1, D1), f32),   # per-tile sum(h^2)
            jax.ShapeDtypeStruct((Bp, DG), f32),
        ),
        compiler_params=cparams,
    )(xm, w1, b1, wn)

    # Full-batch BN statistics from the per-tile partials (tiny O(nbt*D1) reduce; BN
    # couples the whole batch so this cannot live inside a batch-parallel kernel).
    # gamma/beta folded into a single scale/shift applied in pass 2.
    s = jnp.sum(hsum, axis=0)                               # (1, D1)
    q = jnp.sum(hssq, axis=0)                               # (1, D1)
    mean = s / B
    var = jnp.maximum(q / B - mean * mean, 0.0)             # biased (training-mode) var
    inv_std = lax.rsqrt(var + 1e-5)
    gamma = params["gamma"].reshape(1, D1).astype(f32)
    beta = params["beta"].reshape(1, D1).astype(f32)
    scale = gamma * inv_std
    shift = beta - mean * scale

    pred = pl.pallas_call(
        _make_pass2_kernel(matmul_dtype),
        grid=(nbt,),
        in_specs=[
            pl.BlockSpec((TB, D1), lambda i: (i, 0)),
            resident((1, D1)),
            resident((1, D1)),
            resident((D1, D2)),
            resident((1, D2)),
        ],
        out_specs=pl.BlockSpec((TB, D2), lambda i: (i, 0)),
        out_shape=jax.ShapeDtypeStruct((Bp, D2), f32),
        compiler_params=cparams,
    )(h, scale, shift, params["w2"].astype(matmul_dtype),
      params["b2"].reshape(1, D2).astype(f32))

    return pred[:B], cld[:B]


# --------------------------------------------------------------------------------
# Params / reference / test
# --------------------------------------------------------------------------------
def init_params(key, pred_size=(32, 16, 32)):
    """Deterministic params mirroring the PyTorch module's __init__ shapes.
    Linear weights stored as (in, out) (torch W.T); biases / BN affine as (1, out)."""
    D0, D1, D2 = pred_size
    k1, k2, k3, k4, k5 = jax.random.split(key, 5)

    bound1 = 1.0 / jnp.sqrt(D0)
    w1 = jax.random.uniform(k1, (D0, D1), jnp.float32, -bound1, bound1)
    b1 = jax.random.uniform(k2, (1, D1), jnp.float32, -bound1, bound1)

    gamma = jnp.ones((1, D1), jnp.float32)    # BatchNorm1d affine init
    beta = jnp.zeros((1, D1), jnp.float32)

    bound2 = 1.0 / jnp.sqrt(D1)
    w2 = jax.random.uniform(k3, (D1, D2), jnp.float32, -bound2, bound2)
    b2 = jax.random.uniform(k4, (1, D2), jnp.float32, -bound2, bound2)

    # NormedLinear weight (in, 2*hidden): uniform(-1,1).renorm_(2,1,1e-5).mul_(1e5)
    # => each column rescaled to unit L2 norm.
    wg = jax.random.uniform(k5, (D0, 2 * D1), jnp.float32, -1.0, 1.0)
    wg = wg / jnp.sqrt(jnp.sum(wg * wg, axis=0, keepdims=True))

    return {"w1": w1, "b1": b1, "gamma": gamma, "beta": beta,
            "w2": w2, "b2": b2, "wg": wg}


def _reference(x, p):
    """Pure-JAX reference of the PyTorch forward (training-mode BatchNorm)."""
    h = x @ p["w1"] + p["b1"]
    mean = jnp.mean(h, axis=0, keepdims=True)
    var = jnp.mean((h - mean) ** 2, axis=0, keepdims=True)
    h = (h - mean) / jnp.sqrt(var + 1e-5) * p["gamma"] + p["beta"]
    h = jnp.maximum(h, 0.0)
    pred = h @ p["w2"] + p["b2"]

    xn = x / jnp.maximum(jnp.linalg.norm(x, axis=1, keepdims=True), 1e-12)
    wn = p["wg"] / jnp.maximum(jnp.linalg.norm(p["wg"], axis=0, keepdims=True), 1e-12)
    cld = xn @ wn
    cld = cld / jnp.sqrt(jnp.sum(cld * cld, axis=1, keepdims=True))
    return pred, cld


if __name__ == "__main__":
    D0, D1, D2 = 32, 16, 32          # small pred_size = [32, 16, 32]
    DG = 2 * D1
    key = jax.random.PRNGKey(0)
    kx, kp, kx2 = jax.random.split(key, 3)
    params = init_params(kp, (D0, D1, D2))

    # --- exact-math path (f32 matmuls), multi-tile batch grid (16 rows, TB=8) ----
    B = 16
    x = jax.random.normal(kx, (B, D0), jnp.float32)
    fwd_f32 = jax.jit(functools.partial(pred_and_cld, online=True,
                                        block_b=8, matmul_dtype=jnp.float32))
    pred, cld = fwd_f32(x, params)
    jax.block_until_ready((pred, cld))
    pred_ref, cld_ref = _reference(x, params)
    assert pred.shape == (B, D2) and cld.shape == (B, DG)
    assert jnp.allclose(pred, pred_ref, atol=5e-4, rtol=5e-4)
    assert jnp.allclose(cld, cld_ref, atol=5e-4, rtol=5e-4)

    # online=False -> CLD-only kernel (predictor branch never executes)
    cld_only = jax.jit(functools.partial(pred_and_cld, online=False,
                                         block_b=8, matmul_dtype=jnp.float32))(x, params)
    jax.block_until_ready(cld_only)
    assert jnp.allclose(cld_only, cld_ref, atol=5e-4, rtol=5e-4)

    # --- default bf16-MXU path, ragged batch (exercises padding + stat masking) --
    B2 = 12
    x2 = jax.random.normal(kx2, (B2, D0), jnp.float32)
    pred2, cld2 = jax.jit(functools.partial(pred_and_cld, online=True,
                                            block_b=8))(x2, params)
    jax.block_until_ready((pred2, cld2))
    pred2_ref, cld2_ref = _reference(x2, params)
    assert pred2.shape == (B2, D2) and cld2.shape == (B2, DG)
    assert jnp.all(jnp.isfinite(pred2)) and jnp.all(jnp.isfinite(cld2))
    assert jnp.allclose(pred2, pred2_ref, atol=5e-2, rtol=5e-2)
    assert jnp.allclose(cld2, cld2_ref, atol=5e-2, rtol=5e-2)

    print("KERNEL_OK")
</pallas_src>

<mosaic_0001>
module attributes {stable_mosaic.version = 11 : i64} {
  func.func @kernel(%arg0: i32, %arg1: memref<8x32xf32, #tpu.memory_space<vmem>>, %arg2: memref<32x16xf32, #tpu.memory_space<vmem>>, %arg3: memref<1x16xf32, #tpu.memory_space<vmem>>, %arg4: memref<32x32xf32, #tpu.memory_space<vmem>>, %arg5: memref<8x16xf32, #tpu.memory_space<vmem>>, %arg6: memref<1x1x16xf32, #tpu.memory_space<vmem>>, %arg7: memref<1x1x16xf32, #tpu.memory_space<vmem>>, %arg8: memref<8x32xf32, #tpu.memory_space<vmem>>) attributes {dimension_semantics = [#tpu.dimension_semantics<parallel>], iteration_bounds = array<i64: 2>, scalar_prefetch = 0 : i64, scratch_operands = 0 : i64, tpu.core_type = #tpu.core_type<tc>, window_params = [{transform_indices = @transform_0, window_bounds = array<i64: 8, 32>}, {pipeline_mode = #tpu.pipeline_mode<synchronous>, transform_indices = @transform_1, window_bounds = array<i64: 32, 16>}, {pipeline_mode = #tpu.pipeline_mode<synchronous>, transform_indices = @transform_2, window_bounds = array<i64: 1, 16>}, {pipeline_mode = #tpu.pipeline_mode<synchronous>, transform_indices = @transform_3, window_bounds = array<i64: 32, 32>}, {transform_indices = @transform_4, window_bounds = array<i64: 8, 16>}, {transform_indices = @transform_5, window_bounds = array<i64: 1, 1, 16>}, {transform_indices = @transform_6, window_bounds = array<i64: 1, 1, 16>}, {transform_indices = @transform_7, window_bounds = array<i64: 8, 32>}]} {
    %c0 = arith.constant 0 : index
    %c0_0 = arith.constant 0 : index
    %0 = vector.load %arg1[%c0, %c0_0] : memref<8x32xf32, #tpu.memory_space<vmem>>, vector<8x32xf32>
    %c0_1 = arith.constant 0 : index
    %c0_2 = arith.constant 0 : index
    %1 = vector.load %arg2[%c0_1, %c0_2] : memref<32x16xf32, #tpu.memory_space<vmem>>, vector<32x16xf32>
    %cst = arith.constant dense<0.000000e+00> : vector<8x16xf32>
    %2 = tpu.matmul %0, %1, %cst {dimension_numbers = #tpu.dot_dimension_numbers<[1], [0], [0], [1], [0, 0, 1, 1], [], []>} : vector<8x32xf32>, vector<32x16xf32>, vector<8x16xf32> -> vector<8x16xf32>
    %c0_3 = arith.constant 0 : index
    %c0_4 = arith.constant 0 : index
    %3 = vector.load %arg3[%c0_3, %c0_4] : memref<1x16xf32, #tpu.memory_space<vmem>>, vector<1x16xf32>
    %4 = vector.broadcast %3 : vector<1x16xf32> to vector<8x16xf32>
    %5 = arith.addf %2, %4 : vector<8x16xf32>
    %c0_5 = arith.constant 0 : index
    %c0_6 = arith.constant 0 : index
    %6 = vector.load %arg5[%c0_5, %c0_6] : memref<8x16xf32, #tpu.memory_space<vmem>>, vector<8x16xf32>
    tpu.vector_store %arg5[%c0_5, %c0_6], %5 {strides = array<i32>} : memref<8x16xf32, #tpu.memory_space<vmem>>, vector<8x16xf32>,
    %c8_i32 = arith.constant 8 : i32
    %7 = arith.muli %arg0, %c8_i32 : i32
    %8 = tpu.iota {dimensions = array<i32: 0>} : vector<8x1xi32>
    %9 = vector.broadcast %7 : i32 to vector<8x1xi32>
    %10 = arith.addi %9, %8 : vector<8x1xi32>
    %c16_i32 = arith.constant 16 : i32
    %11 = vector.broadcast %c16_i32 : i32 to vector<8x1xi32>
    %12 = arith.cmpi slt, %10, %11 : vector<8x1xi32>
    %13 = arith.extui %12 : vector<8x1xi1> to vector<8x1xi32>
    %14 = arith.sitofp %13 : vector<8x1xi32> to vector<8x1xf32>
    %15 = vector.broadcast %14 : vector<8x1xf32> to vector<8x16xf32>
    %16 = arith.mulf %5, %15 : vector<8x16xf32>
    %cst_7 = arith.constant dense<0.000000e+00> : vector<16xf32>
    %17 = vector.multi_reduction <add>, %16, %cst_7 [0] : vector<8x16xf32> to vector<16xf32>
    %18 = vector.shape_cast %17 : vector<16xf32> to vector<1x16xf32>
    %19 = arith.mulf %16, %5 : vector<8x16xf32>
    %cst_8 = arith.constant dense<0.000000e+00> : vector<16xf32>
    %20 = vector.multi_reduction <add>, %19, %cst_8 [0] : vector<8x16xf32> to vector<16xf32>
    %21 = vector.shape_cast %20 : vector<16xf32> to vector<1x16xf32>
    %22 = vector.shape_cast %18 : vector<1x16xf32> to vector<1x1x16xf32>
    %c0_9 = arith.constant 0 : index
    %c0_10 = arith.constant 0 : index
    %c0_11 = arith.constant 0 : index
    %23 = vector.load %arg6[%c0_9, %c0_10, %c0_11] : memref<1x1x16xf32, #tpu.memory_space<vmem>>, vector<1x1x16xf32>
    tpu.vector_store %arg6[%c0_9, %c0_10, %c0_11], %22 {strides = array<i32>} : memref<1x1x16xf32, #tpu.memory_space<vmem>>, vector<1x1x16xf32>,
    %24 = vector.shape_cast %21 : vector<1x16xf32> to vector<1x1x16xf32>
    %c0_12 = arith.constant 0 : index
    %c0_13 = arith.constant 0 : index
    %c0_14 = arith.constant 0 : index
    %25 = vector.load %arg7[%c0_12, %c0_13, %c0_14] : memref<1x1x16xf32, #tpu.memory_space<vmem>>, vector<1x1x16xf32>
    tpu.vector_store %arg7[%c0_12, %c0_13, %c0_14], %24 {strides = array<i32>} : memref<1x1x16xf32, #tpu.memory_space<vmem>>, vector<1x1x16xf32>,
    %c0_15 = arith.constant 0 : index
    %c0_16 = arith.constant 0 : index
    %26 = vector.load %arg4[%c0_15, %c0_16] : memref<32x32xf32, #tpu.memory_space<vmem>>, vector<32x32xf32>
    %cst_17 = arith.constant dense<0.000000e+00> : vector<8x32xf32>
    %27 = tpu.matmul %0, %26, %cst_17 {dimension_numbers = #tpu.dot_dimension_numbers<[1], [0], [0], [1], [0, 0, 1, 1], [], []>} : vector<8x32xf32>, vector<32x32xf32>, vector<8x32xf32> -> vector<8x32xf32>
    %28 = arith.mulf %27, %27 : vector<8x32xf32>
    %cst_18 = arith.constant dense<0.000000e+00> : vector<8xf32>
    %29 = vector.multi_reduction <add>, %28, %cst_18 [1] : vector<8x32xf32> to vector<8xf32>
    %30 = vector.shape_cast %29 : vector<8xf32> to vector<8x1xf32>
    %31 = math.rsqrt %30 : vector<8x1xf32>
    %32 = vector.broadcast %31 : vector<8x1xf32> to vector<8x32xf32>
    %33 = arith.mulf %27, %32 : vector<8x32xf32>
    %c0_19 = arith.constant 0 : index
    %c0_20 = arith.constant 0 : index
    %34 = vector.load %arg8[%c0_19, %c0_20] : memref<8x32xf32, #tpu.memory_space<vmem>>, vector<8x32xf32>
    tpu.vector_store %arg8[%c0_19, %c0_20], %33 {strides = array<i32>} : memref<8x32xf32, #tpu.memory_space<vmem>>, vector<8x32xf32>,
    return
  }
  func.func @transform_0(%arg0: i32) -> (i32, i32) {
    %c0_i32 = arith.constant 0 : i32
    %c0_i32_0 = arith.constant 0 : i32
    return %arg0, %c0_i32 : i32, i32
  }
  func.func @transform_1(%arg0: i32) -> (i32, i32) {
    %c0_i32 = arith.constant 0 : i32
    %c0_i32_0 = arith.constant 0 : i32
    %c0_i32_1 = arith.constant 0 : i32
    return %c0_i32, %c0_i32_0 : i32, i32
  }
  func.func @transform_2(%arg0: i32) -> (i32, i32) {
    %c0_i32 = arith.constant 0 : i32
    %c0_i32_0 = arith.constant 0 : i32
    %c0_i32_1 = arith.constant 0 : i32
    return %c0_i32, %c0_i32_0 : i32, i32
  }
  func.func @transform_3(%arg0: i32) -> (i32, i32) {
    %c0_i32 = arith.constant 0 : i32
    %c0_i32_0 = arith.constant 0 : i32
    %c0_i32_1 = arith.constant 0 : i32
    return %c0_i32, %c0_i32_0 : i32, i32
  }
  func.func @transform_4(%arg0: i32) -> (i32, i32) {
    %c0_i32 = arith.constant 0 : i32
    %c0_i32_0 = arith.constant 0 : i32
    return %arg0, %c0_i32 : i32, i32
  }
  func.func @transform_5(%arg0: i32) -> (i32, i32, i32) {
    %c0_i32 = arith.constant 0 : i32
    %c0_i32_0 = arith.constant 0 : i32
    %c0_i32_1 = arith.constant 0 : i32
    return %arg0, %c0_i32, %c0_i32_0 : i32, i32, i32
  }
  func.func @transform_6(%arg0: i32) -> (i32, i32, i32) {
    %c0_i32 = arith.constant 0 : i32
    %c0_i32_0 = arith.constant 0 : i32
    %c0_i32_1 = arith.constant 0 : i32
    return %arg0, %c0_i32, %c0_i32_0 : i32, i32, i32
  }
  func.func @transform_7(%arg0: i32) -> (i32, i32) {
    %c0_i32 = arith.constant 0 : i32
    %c0_i32_0 = arith.constant 0 : i32
    return %arg0, %c0_i32 : i32, i32
  }
}

module attributes {stable_mosaic.version = 11 : i64} {
  func.func @kernel(%arg0: i32, %arg1: memref<8x16xf32, #tpu.memory_space<vmem>>, %arg2: memref<1x16xf32, #tpu.memory_space<vmem>>, %arg3: memref<1x16xf32, #tpu.memory_space<vmem>>, %arg4: memref<16x32xf32, #tpu.memory_space<vmem>>, %arg5: memref<1x32xf32, #tpu.memory_space<vmem>>, %arg6: memref<8x32xf32, #tpu.memory_space<vmem>>) attributes {dimension_semantics = [#tpu.dimension_semantics<parallel>], iteration_bounds = array<i64: 2>, scalar_prefetch = 0 : i64, scratch_operands = 0 : i64, tpu.core_type = #tpu.core_type<tc>, window_params = [{transform_indices = @transform_0, window_bounds = array<i64: 8, 16>}, {pipeline_mode = #tpu.pipeline_mode<synchronous>, transform_indices = @transform_1, window_bounds = array<i64: 1, 16>}, {pipeline_mode = #tpu.pipeline_mode<synchronous>, transform_indices = @transform_2, window_bounds = array<i64: 1, 16>}, {pipeline_mode = #tpu.pipeline_mode<synchronous>, transform_indices = @transform_3, window_bounds = array<i64: 16, 32>}, {pipeline_mode = #tpu.pipeline_mode<synchronous>, transform_indices = @transform_4, window_bounds = array<i64: 1, 32>}, {transform_indices = @transform_5, window_bounds = array<i64: 8, 32>}]} {
    %c0 = arith.constant 0 : index
    %c0_0 = arith.constant 0 : index
    %0 = vector.load %arg1[%c0, %c0_0] : memref<8x16xf32, #tpu.memory_space<vmem>>, vector<8x16xf32>
    %c0_1 = arith.constant 0 : index
    %c0_2 = arith.constant 0 : index
    %1 = vector.load %arg2[%c0_1, %c0_2] : memref<1x16xf32, #tpu.memory_space<vmem>>, vector<1x16xf32>
    %2 = vector.broadcast %1 : vector<1x16xf32> to vector<8x16xf32>
    %3 = arith.mulf %0, %2 : vector<8x16xf32>
    %c0_3 = arith.constant 0 : index
    %c0_4 = arith.constant 0 : index
    %4 = vector.load %arg3[%c0_3, %c0_4] : memref<1x16xf32, #tpu.memory_space<vmem>>, vector<1x16xf32>
    %5 = vector.broadcast %4 : vector<1x16xf32> to vector<8x16xf32>
    %6 = arith.addf %3, %5 : vector<8x16xf32>
    %cst = arith.constant 0.000000e+00 : f32
    %7 = vector.broadcast %cst : f32 to vector<8x16xf32>
    %8 = arith.maximumf %6, %7 : vector<8x16xf32>
    %c0_5 = arith.constant 0 : index
    %c0_6 = arith.constant 0 : index
    %9 = vector.load %arg4[%c0_5, %c0_6] : memref<16x32xf32, #tpu.memory_space<vmem>>, vector<16x32xf32>
    %cst_7 = arith.constant dense<0.000000e+00> : vector<8x32xf32>
    %10 = tpu.matmul %8, %9, %cst_7 {dimension_numbers = #tpu.dot_dimension_numbers<[1], [0], [0], [1], [0, 0, 1, 1], [], []>} : vector<8x16xf32>, vector<16x32xf32>, vector<8x32xf32> -> vector<8x32xf32>
    %c0_8 = arith.constant 0 : index
    %c0_9 = arith.constant 0 : index
    %11 = vector.load %arg5[%c0_8, %c0_9] : memref<1x32xf32, #tpu.memory_space<vmem>>, vector<1x32xf32>
    %12 = vector.broadcast %11 : vector<1x32xf32> to vector<8x32xf32>
    %13 = arith.addf %10, %12 : vector<8x32xf32>
    %c0_10 = arith.constant 0 : index
    %c0_11 = arith.constant 0 : index
    %14 = vector.load %arg6[%c0_10, %c0_11] : memref<8x32xf32, #tpu.memory_space<vmem>>, vector<8x32xf32>
    tpu.vector_store %arg6[%c0_10, %c0_11], %13 {strides = array<i32>} : memref<8x32xf32, #tpu.memory_space<vmem>>, vector<8x32xf32>,
    return
  }
  func.func @transform_0(%arg0: i32) -> (i32, i32) {
    %c0_i32 = arith.constant 0 : i32
    %c0_i32_0 = arith.constant 0 : i32
    return %arg0, %c0_i32 : i32, i32
  }
  func.func @transform_1(%arg0: i32) -> (i32, i32) {
    %c0_i32 = arith.constant 0 : i32
    %c0_i32_0 = arith.constant 0 : i32
    %c0_i32_1 = arith.constant 0 : i32
    return %c0_i32, %c0_i32_0 : i32, i32
  }
  func.func @transform_2(%arg0: i32) -> (i32, i32) {
    %c0_i32 = arith.constant 0 : i32
    %c0_i32_0 = arith.constant 0 : i32
    %c0_i32_1 = arith.constant 0 : i32
    return %c0_i32, %c0_i32_0 : i32, i32
  }
  func.func @transform_3(%arg0: i32) -> (i32, i32) {
    %c0_i32 = arith.constant 0 : i32
    %c0_i32_0 = arith.constant 0 : i32
    %c0_i32_1 = arith.constant 0 : i32
    return %c0_i32, %c0_i32_0 : i32, i32
  }
  func.func @transform_4(%arg0: i32) -> (i32, i32) {
    %c0_i32 = arith.constant 0 : i32
    %c0_i32_0 = arith.constant 0 : i32
    %c0_i32_1 = arith.constant 0 : i32
    return %c0_i32, %c0_i32_0 : i32, i32
  }
  func.func @transform_5(%arg0: i32) -> (i32, i32) {
    %c0_i32 = arith.constant 0 : i32
    %c0_i32_0 = arith.constant 0 : i32
    return %arg0, %c0_i32 : i32, i32
  }
}

</mosaic_0001>

<llo_original>
// kernel: pred_and_cld.2
$region0: #{pred_and_cld.2}
  #allocation0 [shape = 'u32[]', space=smem, size = 0x4, offset = 0x4, fixed_abs, tag = 'smem constant byte address 0x4 - core index']
  #allocation1 [shape = 'u32[72,128]{1,0:T(1,128)}', space=vmem, size = 0x9000, scoped, tag = 'internal scratch']
  %s0 = inlined_call_operand.vmem [shape: f32[16,32], index: 0, kind: input, shape index: {}]
  %s1 = inlined_call_operand.vmem [shape: f32[32,16], index: 1, kind: input, shape index: {}]
  %s2 = inlined_call_operand.vmem [shape: f32[1,16], index: 2, kind: input, shape index: {}]
  %s3 = inlined_call_operand.vmem [shape: f32[32,32], index: 3, kind: input, shape index: {}]
  %s4 = inlined_call_operand.vmem [shape: f32[16,16], index: 4, kind: output, shape index: {0}]
  %s5 = inlined_call_operand.vmem [shape: f32[2,1,16], index: 5, kind: output, shape index: {1}]
  %s6 = inlined_call_operand.vmem [shape: f32[2,1,16], index: 6, kind: output, shape index: {2}]
  %s7 = inlined_call_operand.hbm [shape: f32[16,32], index: 7, kind: output, shape index: {3}]
  %8 = xla_tuple %s4, %s5, %s6, %s7
  %s9 = sld [smem:[#allocation0]]
  $region73: #{pred_and_cld.2} parent=0
    _
  %s11 = ssub.s32 1, %s9
  %s12 = scalar_select 0, %s11, %s9
  $region1: #{pred_and_cld.2} parent=0
    #allocation2 [shape = 'u8[8192]{0}', space=vmem, size = 0x2000, scoped, tag = 'output window, operand 3']
    #allocation3 [shape = 's32[2]{0}', space=sflag, size = 0x8, scoped, tag = 'scoped memory for pred_and_cld.2']
    %13 = vsyncpa [#allocation3], 0
    %s14 = scalar_lea.sflag [#allocation3], 1
    %15 = vsyncpa %s14, 0
    loop: start=0, step=1, limit=4
    $region2: #{pred_and_cld.2} parent=1 // loop_pre_header
      _
    $region3: #{pred_and_cld.2} parent=1 // loop_header
      %s17 = sphi 0, %s21
      %p18 = scmp.ge.s32.totalorder %s17, 4
      %s27 = sphi 0, %s29
      %s30 = sphi 0, %s27
      %s31 = sphi 0, %s30
      %s47 = sphi 0, %s31
      %s51 = sphi 0, %s51
      %s53 = sphi 0, %s51
      %s54 = sphi 0, %s53
      %s68 = sphi 0, %s54
      %s72 = sphi 0, %s72
      %s74 = sphi 0, %s72
      %s75 = sphi 0, %s74
      %s89 = sphi 0, %s75
      %s93 = sphi 0, %s93
      %s95 = sphi 0, %s93
      %s96 = sphi 0, %s95
      %s110 = sphi 0, %s96
      %s116 = sphi 0, %s118
      %s119 = sphi 0, %s116
      %s120 = sphi 0, %s119
      %s136 = sphi 0, %s120
      %s142 = sphi 0, %s144
      %s145 = sphi 0, %s142
      %s146 = sphi 0, %s145
      %s162 = sphi 0, %s146
      %s168 = sphi 0, %s170
      %s171 = sphi 0, %s168
      %s172 = sphi 0, %s171
      %s188 = sphi 0, %s172
      %s194 = sphi 0, %s196
      %s197 = sphi 0, %s194
      %s198 = sphi 0, %s197
      %s214 = sphi 0, %s198
    $region4: #{pred_and_cld.2} parent=1 // loop_header_branch
      %20 = sbr.rel (%p18) target = $region8
    $region5: #{pred_and_cld.2} parent=1 // loop_body
      %s22 = ssub.s32 %s17, 1
      %s23 = ssub.s32 %s17, 2
      %s24 = sadd.s32 %s17, 1
      %s25 = ssub.s32 %s17, %s24
      %p26 = scmp.eq.s32.totalorder %s25, 0
      %s28 = sadd.s32 %s27, 1
      %s29 = scalar_select %p26, %s27, %s28
      %p32 = pneg %p26
      %p33 = scmp.eq.s32.totalorder %s17, 1
      %p34 = por %p32, %p33
      %p35 = scmp.ne.s32.totalorder %s27, %s30
      %p36 = scmp.eq.s32.totalorder %s17, 0
      %p37 = por %p35, %p36
      %p38 = scmp.ne.s32.totalorder %s27, %s30
      %p39 = scmp.eq.s32.totalorder %s22, 1
      %p40 = por %p38, %p39
      %p41 = scmp.ne.s32.totalorder %s30, %s31
      %p42 = scmp.eq.s32.totalorder %s22, 0
      %p43 = por %p41, %p42
      %p44 = scmp.ne.s32.totalorder %s30, %s31
      %p45 = scmp.eq.s32.totalorder %s23, 1
      %p46 = por %p44, %p45
      %p48 = scmp.ne.s32.totalorder %s31, %s47
      %p49 = scmp.eq.s32.totalorder %s23, 0
      %p50 = por %p48, %p49
      %s52 = sadd.s32 %s51, 1
      %p55 = scmp.eq.s32.totalorder %s17, 1
      %p56 = scmp.ne.s32.totalorder %s51, %s53
      %p57 = scmp.eq.s32.totalorder %s17, 0
      %p58 = por %p56, %p57
      %p59 = scmp.ne.s32.totalorder %s51, %s53
      %p60 = scmp.eq.s32.totalorder %s22, 1
      %p61 = por %p59, %p60
      %p62 = scmp.ne.s32.totalorder %s53, %s54
      %p63 = scmp.eq.s32.totalorder %s22, 0
      %p64 = por %p62, %p63
      %p65 = scmp.ne.s32.totalorder %s53, %s54
      %p66 = scmp.eq.s32.totalorder %s23, 1
      %p67 = por %p65, %p66
      %p69 = scmp.ne.s32.totalorder %s54, %s68
      %p70 = scmp.eq.s32.totalorder %s23, 0
      %p71 = por %p69, %p70
      %s73 = sadd.s32 %s72, 1
      %p76 = scmp.eq.s32.totalorder %s17, 1
      %p77 = scmp.ne.s32.totalorder %s72, %s74
      %p78 = scmp.eq.s32.totalorder %s17, 0
      %p79 = por %p77, %p78
      %p80 = scmp.ne.s32.totalorder %s72, %s74
      %p81 = scmp.eq.s32.totalorder %s22, 1
      %p82 = por %p80, %p81
      %p83 = scmp.ne.s32.totalorder %s74, %s75
      %p84 = scmp.eq.s32.totalorder %s22, 0
      %p85 = por %p83, %p84
      %p86 = scmp.ne.s32.totalorder %s74, %s75
      %p87 = scmp.eq.s32.totalorder %s23, 1
      %p88 = por %p86, %p87
      %p90 = scmp.ne.s32.totalorder %s75, %s89
      %p91 = scmp.eq.s32.totalorder %s23, 0
      %p92 = por %p90, %p91
      %s94 = sadd.s32 %s93, 1
      %p97 = scmp.eq.s32.totalorder %s17, 1
      %p98 = scmp.ne.s32.totalorder %s93, %s95
      %p99 = scmp.eq.s32.totalorder %s17, 0
      %p100 = por %p98, %p99
      %p101 = scmp.ne.s32.totalorder %s93, %s95
      %p102 = scmp.eq.s32.totalorder %s22, 1
      %p103 = por %p101, %p102
      %p104 = scmp.ne.s32.totalorder %s95, %s96
      %p105 = scmp.eq.s32.totalorder %s22, 0
      %p106 = por %p104, %p105
      %p107 = scmp.ne.s32.totalorder %s95, %s96
      %p108 = scmp.eq.s32.totalorder %s23, 1
      %p109 = por %p107, %p108
      %p111 = scmp.ne.s32.totalorder %s96, %s110
      %p112 = scmp.eq.s32.totalorder %s23, 0
      %p113 = por %p111, %p112
      %s114 = ssub.s32 %s17, %s24
      %p115 = scmp.eq.s32.totalorder %s114, 0
      %s117 = sadd.s32 %s116, 1
      %s118 = scalar_select %p115, %s116, %s117
      %p121 = pneg %p115
      %p122 = scmp.eq.s32.totalorder %s17, 1
      %p123 = por %p121, %p122
      %p124 = scmp.ne.s32.totalorder %s116, %s119
      %p125 = scmp.eq.s32.totalorder %s17, 0
      %p126 = por %p124, %p125
      %p127 = scmp.ne.s32.totalorder %s116, %s119
      %p128 = scmp.eq.s32.totalorder %s22, 1
      %p129 = por %p127, %p128
      %p130 = scmp.ne.s32.totalorder %s119, %s120
      %p131 = scmp.eq.s32.totalorder %s22, 0
      %p132 = por %p130, %p131
      %p133 = scmp.ne.s32.totalorder %s119, %s120
      %p134 = scmp.eq.s32.totalorder %s23, 1
      %p135 = por %p133, %p134
      %p137 = scmp.ne.s32.totalorder %s120, %s136
      %p138 = scmp.eq.s32.totalorder %s23, 0
      %p139 = por %p137, %p138
      %s140 = ssub.s32 %s17, %s24
      %p141 = scmp.eq.s32.totalorder %s140, 0
      %s143 = sadd.s32 %s142, 1
      %s144 = scalar_select %p141, %s142, %s143
      %p147 = pneg %p141
      %p148 = scmp.eq.s32.totalorder %s17, 1
      %p149 = por %p147, %p148
      %p150 = scmp.ne.s32.totalorder %s142, %s145
      %p151 = scmp.eq.s32.totalorder %s17, 0
      %p152 = por %p150, %p151
      %p153 = scmp.ne.s32.totalorder %s142, %s145
      %p154 = scmp.eq.s32.totalorder %s22, 1
      %p155 = por %p153, %p154
      %p156 = scmp.ne.s32.totalorder %s145, %s146
      %p157 = scmp.eq.s32.totalorder %s22, 0
      %p158 = por %p156, %p157
      %p159 = scmp.ne.s32.totalorder %s145, %s146
      %p160 = scmp.eq.s32.totalorder %s23, 1
      %p161 = por %p159, %p160
      %p163 = scmp.ne.s32.totalorder %s146, %s162
      %p164 = scmp.eq.s32.totalorder %s23, 0
      %p165 = por %p163, %p164
      %s166 = ssub.s32 %s17, %s24
      %p167 = scmp.eq.s32.totalorder %s166, 0
      %s169 = sadd.s32 %s168, 1
      %s170 = scalar_select %p167, %s168, %s169
      %p173 = pneg %p167
      %p174 = scmp.eq.s32.totalorder %s17, 1
      %p175 = por %p173, %p174
      %p176 = scmp.ne.s32.totalorder %s168, %s171
      %p177 = scmp.eq.s32.totalorder %s17, 0
      %p178 = por %p176, %p177
      %p179 = scmp.ne.s32.totalorder %s168, %s171
      %p180 = scmp.eq.s32.totalorder %s22, 1
      %p181 = por %p179, %p180
      %p182 = scmp.ne.s32.totalorder %s171, %s172
      %p183 = scmp.eq.s32.totalorder %s22, 0
      %p184 = por %p182, %p183
      %p185 = scmp.ne.s32.totalorder %s171, %s172
      %p186 = scmp.eq.s32.totalorder %s23, 1
      %p187 = por %p185, %p186
      %p189 = scmp.ne.s32.totalorder %s172, %s188
      %p190 = scmp.eq.s32.totalorder %s23, 0
      %p191 = por %p189, %p190
      %s192 = ssub.s32 %s17, %s24
      %p193 = scmp.eq.s32.totalorder %s192, 0
      %s195 = sadd.s32 %s194, 1
      %s196 = scalar_select %p193, %s194, %s195
      %p199 = pneg %p193
      %p200 = scmp.eq.s32.totalorder %s17, 1
      %p201 = por %p199, %p200
      %p202 = scmp.ne.s32.totalorder %s194, %s197
      %p203 = scmp.eq.s32.totalorder %s17, 0
      %p204 = por %p202, %p203
      %p205 = scmp.ne.s32.totalorder %s194, %s197
      %p206 = scmp.eq.s32.totalorder %s22, 1
      %p207 = por %p205, %p206
      %p208 = scmp.ne.s32.totalorder %s197, %s198
      %p209 = scmp.eq.s32.totalorder %s22, 0
      %p210 = por %p208, %p209
      %p211 = scmp.ne.s32.totalorder %s197, %s198
      %p212 = scmp.eq.s32.totalorder %s23, 1
      %p213 = por %p211, %p212
      %p215 = scmp.ne.s32.totalorder %s198, %s214
      %p216 = scmp.eq.s32.totalorder %s23, 0
      %p217 = por %p215, %p216
      %p218 = scmp.le.s32.totalorder 1, %s17
      %p219 = scmp.lt.s32.totalorder %s17, 3
      %p220 = pnand %p218, %p219
      %p221 = pneg %p220
      // Predicated region
      $region9: #{pred_and_cld.2} parent=5 // pred_check
        _
      $region10: #{pred_and_cld.2} parent=5 // pred_check_branch
        %223 = sbr.rel (%p220) target = $region12
      $region11: #{pred_and_cld.2} parent=5 // pred_region
        %s224 = ssub.s32 %s17, 1
        // Predicated region
        $region13: #{pred_and_cld.2} parent=11 // pred_check
          %p225 = pneg %p64
        $region14: #{pred_and_cld.2} parent=11 // pred_check_branch
          %227 = sbr.rel (%p225) target = $region16
        $region15: #{pred_and_cld.2} parent=11 // pred_region
          _
        $region16: #{pred_and_cld.2} parent=11 // pred_fallthru
          _
        // Predicated region
        $region17: #{pred_and_cld.2} parent=11 // pred_check
          %p228 = pneg %p85
        $region18: #{pred_and_cld.2} parent=11 // pred_check_branch
          %230 = sbr.rel (%p228) target = $region20
        $region19: #{pred_and_cld.2} parent=11 // pred_region
          _
        $region20: #{pred_and_cld.2} parent=11 // pred_fallthru
          _
        // Predicated region
        $region21: #{pred_and_cld.2} parent=11 // pred_check
          %p231 = pneg %p106
        $region22: #{pred_and_cld.2} parent=11 // pred_check_branch
          %233 = sbr.rel (%p231) target = $region24
        $region23: #{pred_and_cld.2} parent=11 // pred_region
          _
        $region24: #{pred_and_cld.2} parent=11 // pred_fallthru
          _
      $region12: #{pred_and_cld.2} parent=5 // pred_fallthru
        _
      %p234 = scmp.lt.s32.totalorder %s17, 2
      // Predicated region
      $region25: #{pred_and_cld.2} parent=5 // pred_check
        %p235 = pneg %p234
      $region26: #{pred_and_cld.2} parent=5 // pred_check_branch
        %237 = sbr.rel (%p235) target = $region28
      $region27: #{pred_and_cld.2} parent=5 // pred_region
        // Predicated region
        $region29: #{pred_and_cld.2} parent=27 // pred_check
          %p238 = pneg %p37
        $region30: #{pred_and_cld.2} parent=27 // pred_check_branch
          %240 = sbr.rel (%p238) target = $region32
        $region31: #{pred_and_cld.2} parent=27 // pred_region
          %p241 = scmp.lt.s32.totalorder %s17, 1
          %s242 = scalar_select %p241, %s17, 1
          %s243 = smul.addr %s242, 8
          %s244 = scalar_lea.vmem %s0, %s243
        $region32: #{pred_and_cld.2} parent=27 // pred_fallthru
          _
      $region28: #{pred_and_cld.2} parent=5 // pred_fallthru
        _
      %p245 = scmp.le.s32.totalorder 1, %s17
      %p246 = scmp.lt.s32.totalorder %s17, 3
      %p247 = pnand %p245, %p246
      %p248 = pneg %p247
      // Predicated region
      $region33: #{pred_and_cld.2} parent=5 // pred_check
        _
      $region34: #{pred_and_cld.2} parent=5 // pred_check_branch
        %250 = sbr.rel (%p247) target = $region36
      $region35: #{pred_and_cld.2} parent=5 // pred_region
        %s251 = ssub.s32 %s17, 1
        %p252 = scmp.lt.s32.totalorder %s22, 1
        %s253 = scalar_select %p252, %s22, 1
        %s254 = smul.addr %s253, 8
        %s255 = scalar_lea.vmem %s0, %s254
        %p256 = pneg %p43
        %p257 = pneg %p40
        %p258 = pneg %p64
        %p259 = pneg %p61
        %p260 = pneg %p85
        %p261 = pneg %p82
        %p262 = pneg %p106
        %p263 = pneg %p103
        %p264 = pneg %p132
        %p265 = pneg %p129
        %p266 = scmp.lt.s32.totalorder %s22, 1
        %s267 = scalar_select %p266, %s22, 1
        %s268 = smul.addr %s267, 8
        %s269 = scalar_lea.vmem %s4, %s268
        %p270 = pneg %p158
        %p271 = pneg %p155
        %p272 = scmp.lt.s32.totalorder %s22, 1
        %s273 = scalar_select %p272, %s22, 1
        %s274 = scalar_lea.vmem %s5, %s273
        %p275 = pneg %p184
        %p276 = pneg %p181
        %p277 = scmp.lt.s32.totalorder %s22, 1
        %s278 = scalar_select %p277, %s22, 1
        %s279 = scalar_lea.vmem %s6, %s278
        %p280 = pneg %p210
        %p281 = pneg %p207
        %s282 = sand.u32 %s197, 1
        %s283 = scalar_lea.sflag [#allocation3], %s282
        %s284 = sand.u32 %s197, 1
        %s285 = smul.addr %s284, 8
        %s286 = scalar_lea.vmem [#allocation2], %s285
        %p287 = scmp.lt.s32.totalorder %s22, 1
        %s288 = scalar_select %p287, %s22, 1
        %s289 = smul.addr %s288, 8
        %s290 = scalar_lea.vmem %s0, %s289
        %p291 = scmp.lt.s32.totalorder %s22, 1
        %s292 = scalar_select %p291, %s22, 1
        %s293 = smul.addr %s292, 8
        %s294 = scalar_lea.vmem %s4, %s293
        %p295 = scmp.lt.s32.totalorder %s22, 1
        %s296 = scalar_select %p295, %s22, 1
        %s297 = scalar_lea.vmem %s5, %s296
        %p298 = scmp.lt.s32.totalorder %s22, 1
        %s299 = scalar_select %p298, %s22, 1
        %s300 = scalar_lea.vmem %s6, %s299
        %v301 = vld [vmem:[%s290] sm:$0xff]
        %v302 = vld [vmem:[%s1] sm:$0xff]
        %v303 = vld [vmem:[%s1 + $0x8] sm:$0xff]
        %v304 = vld [vmem:[%s1 + $0x10] sm:$0xff]
        %v305 = vld [vmem:[%s1 + $0x18] sm:$0xff]
        %v306 = vld [vmem:[%s2] sm:$0x1]
        %v308 = vperm.slane %v306, 0
        %vm310 = vcmask 261120
        %v312 = vsel %vm310, %v301, 0
        %314 = vmatpush.msra.mxu0 0.0
        %315 = vmatpush.msra.mxu0 0.0
        %316 = vmatpush.msra.mxu0 0.0
        %317 = vmatpush.msra.mxu0 0.0
        %318 = vmatpush.msra.mxu0 0.0
        %319 = vmatpush.msra.mxu0 0.0
        %320 = vmatpush.msra.mxu0 0.0
        %321 = vmatpush.msra.mxu0 0.0
        %322 = vmatpush.msra.mxu0 0.0
        %323 = vmatpush.msra.mxu0 0.0
        %324 = vmatpush.msra.mxu0 0.0
        %325 = vmatpush.msra.mxu0 0.0
        %326 = vmatpush.msra.mxu0 %v305
        %327 = vmatpush.msra.mxu0 %v304
        %328 = vmatpush.msra.mxu0 %v303
        %329 = vmatpush.msra.mxu0 %v302
        %330 = vmatmul.f32.gmra.mxu0 %v312
        %v331 = vpop.f32.mrf.mxu0
        %v332 = vadd.f32 %v308, %v331
        %333 = vdwg.mxu0
        %vm334 = vcmask 130048
        %335 = vst.msk [vmem:[%s294] sm:$0xff] %vm334, %v332
        %s336 = smul.u32 %s22, 8
        %v337 = vlaneseq
        %v338 = vshrl.u32 %v337, 7
        %v339 = vstv %s336
        %v340 = vadd.s32 %v339, %v338
        %vm341 = vcmp.lt.s32.totalorder %v340, 16
        %v342 = vsel %vm341, 1, 0
        %v343 = vcvt.s32.f32 %v342
        %v344 = vmul.f32 %v332, %v343
        %v345 = vsel %vm334, %v344, 0.0
        %v346 = vrot.slane %v345, 4
        %v347 = vadd.f32 %v345, %v346
        %v348 = vrot.slane %v347, 2
        %v349 = vadd.f32 %v347, %v348
        %v350 = vrot.slane %v349, 1
        %v351 = vadd.f32 %v349, %v350
        %v352 = vmul.f32 %v344, %v332
        %v353 = vsel %vm334, %v352, 0.0
        %v354 = vrot.slane %v353, 4
        %v355 = vadd.f32 %v353, %v354
        %v356 = vrot.slane %v355, 2
        %v357 = vadd.f32 %v355, %v356
        %v358 = vrot.slane %v357, 1
        %v359 = vadd.f32 %v357, %v358
        %vm360 = vcmask 122880
        %361 = vst.msk [vmem:[%s297] sm:$0x1] %vm360, %v351
        %362 = vst.msk [vmem:[%s300] sm:$0x1] %vm360, %v359
        %v363 = vld [vmem:[%s3] sm:$0xff]
        %v364 = vld [vmem:[%s3 + $0x8] sm:$0xff]
        %v365 = vld [vmem:[%s3 + $0x10] sm:$0xff]
        %v366 = vld [vmem:[%s3 + $0x18] sm:$0xff]
        %367 = vmatpush.msra.mxu0 0.0
        %368 = vmatpush.msra.mxu0 0.0
        %369 = vmatpush.msra.mxu0 0.0
        %370 = vmatpush.msra.mxu0 0.0
        %371 = vmatpush.msra.mxu0 0.0
        %372 = vmatpush.msra.mxu0 0.0
        %373 = vmatpush.msra.mxu0 0.0
        %374 = vmatpush.msra.mxu0 0.0
        %375 = vmatpush.msra.mxu0 0.0
        %376 = vmatpush.msra.mxu0 0.0
        %377 = vmatpush.msra.mxu0 0.0
        %378 = vmatpush.msra.mxu0 0.0
        %379 = vmatpush.msra.mxu0 %v366
        %380 = vmatpush.msra.mxu0 %v365
        %381 = vmatpush.msra.mxu0 %v364
        %382 = vmatpush.msra.mxu0 %v363
        %383 = vmatmul.f32.gmra.mxu0 %v312
        %v384 = vpop.f32.mrf.mxu0
        %v385 = vadd.f32 0.0, %v384
        %386 = vdwg.mxu0
        %v387 = vmul.f32 %v385, %v385
        %v388 = vsel %vm310, %v387, 0.0
        %389 = vadd.xlane.f32.xlu0 %v388
        %v390 = vpop.xlane.xlu0 %389
        %v391 = vrsqrt.pop %v390
        %v392 = vmul.f32 %v391, %v390
        %v393 = vmul.f32 %v392, %v391
        %v394 = vmul.f32 0.5, %v393
        %v395 = vsub.f32 1.5, %v394
        %v396 = vmul.f32 %v391, %v395
        %vm397 = vweird.f32 %v390
        %vm398 = vweird.f32 %v391
        %vm399 = vmor %vm397, %vm398
        %v400 = vsel %vm399, %v391, %v396
        %v401 = vmul.f32 %v385, %v400
        %402 = vst.msk [vmem:[%s286] sm:$0xff] %vm310, %v401
        %p403 = scmp.lt.s32.totalorder %s22, 1
        %s404 = scalar_select %p403, %s22, 1
        %s405 = smul.addr %s404, 8
        %s406 = scalar_lea.vmem %s4, %s405
        %p407 = scmp.lt.s32.totalorder %s22, 1
        %s408 = scalar_select %p407, %s22, 1
        %s409 = scalar_lea.vmem %s5, %s408
        %p410 = scmp.lt.s32.totalorder %s22, 1
        %s411 = scalar_select %p410, %s22, 1
        %s412 = scalar_lea.vmem %s6, %s411
        %s413 = sand.u32 %s197, 1
        %s414 = scalar_lea.sflag [#allocation3], %s413
        %s415 = sand.u32 %s197, 1
        %s416 = smul.addr %s415, 8
        %s417 = scalar_lea.vmem [#allocation2], %s416
        // Predicated region
        $region37: #{pred_and_cld.2} parent=35 // pred_check
          %p418 = pneg %p129
        $region38: #{pred_and_cld.2} parent=35 // pred_check_branch
          %420 = sbr.rel (%p418) target = $region40
        $region39: #{pred_and_cld.2} parent=35 // pred_region
          _
        $region40: #{pred_and_cld.2} parent=35 // pred_fallthru
          _
        // Predicated region
        $region41: #{pred_and_cld.2} parent=35 // pred_check
          %p421 = pneg %p155
        $region42: #{pred_and_cld.2} parent=35 // pred_check_branch
          %423 = sbr.rel (%p421) target = $region44
        $region43: #{pred_and_cld.2} parent=35 // pred_region
          _
        $region44: #{pred_and_cld.2} parent=35 // pred_fallthru
          _
        // Predicated region
        $region45: #{pred_and_cld.2} parent=35 // pred_check
          %p424 = pneg %p181
        $region46: #{pred_and_cld.2} parent=35 // pred_check_branch
          %426 = sbr.rel (%p424) target = $region48
        $region47: #{pred_and_cld.2} parent=35 // pred_region
          _
        $region48: #{pred_and_cld.2} parent=35 // pred_fallthru
          _
        // Predicated region
        $region49: #{pred_and_cld.2} parent=35 // pred_check
          %p427 = pneg %p207
        $region50: #{pred_and_cld.2} parent=35 // pred_check_branch
          %429 = sbr.rel (%p427) target = $region52
        $region51: #{pred_and_cld.2} parent=35 // pred_region
          %431 = vsyncadd %s414, 0
          %s432 = smul.addr %s22, 8
          %s433 = scalar_lea.hbm %s7, %s432
          %s435 = sshll.u32 %s417, 4
          %s436 = int_to_ptr.vmem [resolvable:$true] %s435
          %s437 = sshll.u32 %s433, 4
          %s438 = int_to_ptr.hbm [resolvable:$true] %s437
          %440 = dma.vmem_to_hbm [thread:$0]  %s436, 128, %s438, %s414
        $region52: #{pred_and_cld.2} parent=35 // pred_fallthru
          _
      $region36: #{pred_and_cld.2} parent=5 // pred_fallthru
        _
      %p441 = scmp.le.s32.totalorder 2, %s17
      // Predicated region
      $region53: #{pred_and_cld.2} parent=5 // pred_check
        %p442 = pneg %p441
      $region54: #{pred_and_cld.2} parent=5 // pred_check_branch
        %444 = sbr.rel (%p442) target = $region56
      $region55: #{pred_and_cld.2} parent=5 // pred_region
        %s445 = ssub.s32 %s17, 2
        // Predicated region
        $region57: #{pred_and_cld.2} parent=55 // pred_check
          %p446 = pneg %p135
        $region58: #{pred_and_cld.2} parent=55 // pred_check_branch
          %448 = sbr.rel (%p446) target = $region60
        $region59: #{pred_and_cld.2} parent=55 // pred_region
          %p449 = scmp.lt.s32.totalorder %s23, 1
          %s450 = scalar_select %p449, %s23, 1
          %s451 = smul.addr %s450, 8
          %s452 = scalar_lea.vmem %s4, %s451
        $region60: #{pred_and_cld.2} parent=55 // pred_fallthru
          _
        // Predicated region
        $region61: #{pred_and_cld.2} parent=55 // pred_check
          %p453 = pneg %p161
        $region62: #{pred_and_cld.2} parent=55 // pred_check_branch
          %455 = sbr.rel (%p453) target = $region64
        $region63: #{pred_and_cld.2} parent=55 // pred_region
          %p456 = scmp.lt.s32.totalorder %s23, 1
          %s457 = scalar_select %p456, %s23, 1
          %s458 = scalar_lea.vmem %s5, %s457
        $region64: #{pred_and_cld.2} parent=55 // pred_fallthru
          _
        // Predicated region
        $region65: #{pred_and_cld.2} parent=55 // pred_check
          %p459 = pneg %p187
        $region66: #{pred_and_cld.2} parent=55 // pred_check_branch
          %461 = sbr.rel (%p459) target = $region68
        $region67: #{pred_and_cld.2} parent=55 // pred_region
          %p462 = scmp.lt.s32.totalorder %s23, 1
          %s463 = scalar_select %p462, %s23, 1
          %s464 = scalar_lea.vmem %s6, %s463
        $region68: #{pred_and_cld.2} parent=55 // pred_fallthru
          _
        // Predicated region
        $region69: #{pred_and_cld.2} parent=55 // pred_check
          %p465 = pneg %p213
        $region70: #{pred_and_cld.2} parent=55 // pred_check_branch
          %467 = sbr.rel (%p465) target = $region72
        $region71: #{pred_and_cld.2} parent=55 // pred_region
          %s468 = sand.u32 %s198, 1
          %s469 = scalar_lea.sflag [#allocation3], %s468
          %s470 = sand.u32 %s198, 1
          %s471 = smul.addr %s470, 8
          %s472 = scalar_lea.vmem [#allocation2], %s471
          %474 = dma.done %s469, 128
        $region72: #{pred_and_cld.2} parent=55 // pred_fallthru
          _
      $region56: #{pred_and_cld.2} parent=5 // pred_fallthru
        _
    $region6: #{pred_and_cld.2} parent=1 // loop_footer
      %s21 = sadd.s32 1, %s17
    $region7: #{pred_and_cld.2} parent=1 // loop_footer_branch
      %16 = sbr.rel target = $region3
    $region8: #{pred_and_cld.2} parent=1 // loop_exit
      _
    %475 = vsyncpa [#allocation3], 1
    %s476 = scalar_lea.sflag [#allocation3], 1
    %477 = vsyncpa %s476, 1

// kernel: pred_and_cld.3
$region0: #{pred_and_cld.3}
  #allocation0 [shape = 'u32[]', space=smem, size = 0x4, offset = 0x4, fixed_abs, tag = 'smem constant byte address 0x4 - core index']
  #allocation1 [shape = 'u32[72,128]{1,0:T(1,128)}', space=vmem, size = 0x9000, scoped, tag = 'internal scratch']
  %s0 = inlined_call_operand.vmem [shape: f32[16,16], index: 0, kind: input, shape index: {}]
  %s1 = inlined_call_operand.vmem [shape: f32[1,16], index: 1, kind: input, shape index: {}]
  %s2 = inlined_call_operand.vmem [shape: f32[1,16], index: 2, kind: input, shape index: {}]
  %s3 = inlined_call_operand.vmem [shape: f32[16,32], index: 3, kind: input, shape index: {}]
  %s4 = inlined_call_operand.vmem [shape: f32[1,32], index: 4, kind: input, shape index: {}]
  %s5 = inlined_call_operand.hbm [shape: f32[16,32], index: 5, kind: output, shape index: {}]
  %s6 = sld [smem:[#allocation0]]
  $region53: #{pred_and_cld.3} parent=0
    _
  %s8 = ssub.s32 1, %s6
  %s9 = scalar_select 0, %s8, %s6
  $region1: #{pred_and_cld.3} parent=0
    #allocation2 [shape = 'u8[8192]{0}', space=vmem, size = 0x2000, scoped, tag = 'output window, operand 0']
    #allocation3 [shape = 's32[2]{0}', space=sflag, size = 0x8, scoped, tag = 'scoped memory for pred_and_cld.3']
    %10 = vsyncpa [#allocation3], 0
    %s11 = scalar_lea.sflag [#allocation3], 1
    %12 = vsyncpa %s11, 0
    loop: start=0, step=1, limit=4
    $region2: #{pred_and_cld.3} parent=1 // loop_pre_header
      _
    $region3: #{pred_and_cld.3} parent=1 // loop_header
      %s14 = sphi 0, %s18
      %p15 = scmp.ge.s32.totalorder %s14, 4
      %s24 = sphi 0, %s26
      %s27 = sphi 0, %s24
      %s28 = sphi 0, %s27
      %s44 = sphi 0, %s28
      %s48 = sphi 0, %s48
      %s50 = sphi 0, %s48
      %s51 = sphi 0, %s50
      %s65 = sphi 0, %s51
      %s69 = sphi 0, %s69
      %s71 = sphi 0, %s69
      %s72 = sphi 0, %s71
      %s86 = sphi 0, %s72
      %s90 = sphi 0, %s90
      %s92 = sphi 0, %s90
      %s93 = sphi 0, %s92
      %s107 = sphi 0, %s93
      %s111 = sphi 0, %s111
      %s113 = sphi 0, %s111
      %s114 = sphi 0, %s113
      %s128 = sphi 0, %s114
      %s134 = sphi 0, %s136
      %s137 = sphi 0, %s134
      %s138 = sphi 0, %s137
      %s154 = sphi 0, %s138
    $region4: #{pred_and_cld.3} parent=1 // loop_header_branch
      %17 = sbr.rel (%p15) target = $region8
    $region5: #{pred_and_cld.3} parent=1 // loop_body
      %s19 = ssub.s32 %s14, 1
      %s20 = ssub.s32 %s14, 2
      %s21 = sadd.s32 %s14, 1
      %s22 = ssub.s32 %s14, %s21
      %p23 = scmp.eq.s32.totalorder %s22, 0
      %s25 = sadd.s32 %s24, 1
      %s26 = scalar_select %p23, %s24, %s25
      %p29 = pneg %p23
      %p30 = scmp.eq.s32.totalorder %s14, 1
      %p31 = por %p29, %p30
      %p32 = scmp.ne.s32.totalorder %s24, %s27
      %p33 = scmp.eq.s32.totalorder %s14, 0
      %p34 = por %p32, %p33
      %p35 = scmp.ne.s32.totalorder %s24, %s27
      %p36 = scmp.eq.s32.totalorder %s19, 1
      %p37 = por %p35, %p36
      %p38 = scmp.ne.s32.totalorder %s27, %s28
      %p39 = scmp.eq.s32.totalorder %s19, 0
      %p40 = por %p38, %p39
      %p41 = scmp.ne.s32.totalorder %s27, %s28
      %p42 = scmp.eq.s32.totalorder %s20, 1
      %p43 = por %p41, %p42
      %p45 = scmp.ne.s32.totalorder %s28, %s44
      %p46 = scmp.eq.s32.totalorder %s20, 0
      %p47 = por %p45, %p46
      %s49 = sadd.s32 %s48, 1
      %p52 = scmp.eq.s32.totalorder %s14, 1
      %p53 = scmp.ne.s32.totalorder %s48, %s50
      %p54 = scmp.eq.s32.totalorder %s14, 0
      %p55 = por %p53, %p54
      %p56 = scmp.ne.s32.totalorder %s48, %s50
      %p57 = scmp.eq.s32.totalorder %s19, 1
      %p58 = por %p56, %p57
      %p59 = scmp.ne.s32.totalorder %s50, %s51
      %p60 = scmp.eq.s32.totalorder %s19, 0
      %p61 = por %p59, %p60
      %p62 = scmp.ne.s32.totalorder %s50, %s51
      %p63 = scmp.eq.s32.totalorder %s20, 1
      %p64 = por %p62, %p63
      %p66 = scmp.ne.s32.totalorder %s51, %s65
      %p67 = scmp.eq.s32.totalorder %s20, 0
      %p68 = por %p66, %p67
      %s70 = sadd.s32 %s69, 1
      %p73 = scmp.eq.s32.totalorder %s14, 1
      %p74 = scmp.ne.s32.totalorder %s69, %s71
      %p75 = scmp.eq.s32.totalorder %s14, 0
      %p76 = por %p74, %p75
      %p77 = scmp.ne.s32.totalorder %s69, %s71
      %p78 = scmp.eq.s32.totalorder %s19, 1
      %p79 = por %p77, %p78
      %p80 = scmp.ne.s32.totalorder %s71, %s72
      %p81 = scmp.eq.s32.totalorder %s19, 0
      %p82 = por %p80, %p81
      %p83 = scmp.ne.s32.totalorder %s71, %s72
      %p84 = scmp.eq.s32.totalorder %s20, 1
      %p85 = por %p83, %p84
      %p87 = scmp.ne.s32.totalorder %s72, %s86
      %p88 = scmp.eq.s32.totalorder %s20, 0
      %p89 = por %p87, %p88
      %s91 = sadd.s32 %s90, 1
      %p94 = scmp.eq.s32.totalorder %s14, 1
      %p95 = scmp.ne.s32.totalorder %s90, %s92
      %p96 = scmp.eq.s32.totalorder %s14, 0
      %p97 = por %p95, %p96
      %p98 = scmp.ne.s32.totalorder %s90, %s92
      %p99 = scmp.eq.s32.totalorder %s19, 1
      %p100 = por %p98, %p99
      %p101 = scmp.ne.s32.totalorder %s92, %s93
      %p102 = scmp.eq.s32.totalorder %s19, 0
      %p103 = por %p101, %p102
      %p104 = scmp.ne.s32.totalorder %s92, %s93
      %p105 = scmp.eq.s32.totalorder %s20, 1
      %p106 = por %p104, %p105
      %p108 = scmp.ne.s32.totalorder %s93, %s107
      %p109 = scmp.eq.s32.totalorder %s20, 0
      %p110 = por %p108, %p109
      %s112 = sadd.s32 %s111, 1
      %p115 = scmp.eq.s32.totalorder %s14, 1
      %p116 = scmp.ne.s32.totalorder %s111, %s113
      %p117 = scmp.eq.s32.totalorder %s14, 0
      %p118 = por %p116, %p117
      %p119 = scmp.ne.s32.totalorder %s111, %s113
      %p120 = scmp.eq.s32.totalorder %s19, 1
      %p121 = por %p119, %p120
      %p122 = scmp.ne.s32.totalorder %s113, %s114
      %p123 = scmp.eq.s32.totalorder %s19, 0
      %p124 = por %p122, %p123
      %p125 = scmp.ne.s32.totalorder %s113, %s114
      %p126 = scmp.eq.s32.totalorder %s20, 1
      %p127 = por %p125, %p126
      %p129 = scmp.ne.s32.totalorder %s114, %s128
      %p130 = scmp.eq.s32.totalorder %s20, 0
      %p131 = por %p129, %p130
      %s132 = ssub.s32 %s14, %s21
      %p133 = scmp.eq.s32.totalorder %s132, 0
      %s135 = sadd.s32 %s134, 1
      %s136 = scalar_select %p133, %s134, %s135
      %p139 = pneg %p133
      %p140 = scmp.eq.s32.totalorder %s14, 1
      %p141 = por %p139, %p140
      %p142 = scmp.ne.s32.totalorder %s134, %s137
      %p143 = scmp.eq.s32.totalorder %s14, 0
      %p144 = por %p142, %p143
      %p145 = scmp.ne.s32.totalorder %s134, %s137
      %p146 = scmp.eq.s32.totalorder %s19, 1
      %p147 = por %p145, %p146
      %p148 = scmp.ne.s32.totalorder %s137, %s138
      %p149 = scmp.eq.s32.totalorder %s19, 0
      %p150 = por %p148, %p149
      %p151 = scmp.ne.s32.totalorder %s137, %s138
      %p152 = scmp.eq.s32.totalorder %s20, 1
      %p153 = por %p151, %p152
      %p155 = scmp.ne.s32.totalorder %s138, %s154
      %p156 = scmp.eq.s32.totalorder %s20, 0
      %p157 = por %p155, %p156
      %p158 = scmp.le.s32.totalorder 1, %s14
      %p159 = scmp.lt.s32.totalorder %s14, 3
      %p160 = pnand %p158, %p159
      %p161 = pneg %p160
      // Predicated region
      $region9: #{pred_and_cld.3} parent=5 // pred_check
        _
      $region10: #{pred_and_cld.3} parent=5 // pred_check_branch
        %163 = sbr.rel (%p160) target = $region12
      $region11: #{pred_and_cld.3} parent=5 // pred_region
        %s164 = ssub.s32 %s14, 1
        // Predicated region
        $region13: #{pred_and_cld.3} parent=11 // pred_check
          %p165 = pneg %p61
        $region14: #{pred_and_cld.3} parent=11 // pred_check_branch
          %167 = sbr.rel (%p165) target = $region16
        $region15: #{pred_and_cld.3} parent=11 // pred_region
          _
        $region16: #{pred_and_cld.3} parent=11 // pred_fallthru
          _
        // Predicated region
        $region17: #{pred_and_cld.3} parent=11 // pred_check
          %p168 = pneg %p82
        $region18: #{pred_and_cld.3} parent=11 // pred_check_branch
          %170 = sbr.rel (%p168) target = $region20
        $region19: #{pred_and_cld.3} parent=11 // pred_region
          _
        $region20: #{pred_and_cld.3} parent=11 // pred_fallthru
          _
        // Predicated region
        $region21: #{pred_and_cld.3} parent=11 // pred_check
          %p171 = pneg %p103
        $region22: #{pred_and_cld.3} parent=11 // pred_check_branch
          %173 = sbr.rel (%p171) target = $region24
        $region23: #{pred_and_cld.3} parent=11 // pred_region
          _
        $region24: #{pred_and_cld.3} parent=11 // pred_fallthru
          _
        // Predicated region
        $region25: #{pred_and_cld.3} parent=11 // pred_check
          %p174 = pneg %p124
        $region26: #{pred_and_cld.3} parent=11 // pred_check_branch
          %176 = sbr.rel (%p174) target = $region28
        $region27: #{pred_and_cld.3} parent=11 // pred_region
          _
        $region28: #{pred_and_cld.3} parent=11 // pred_fallthru
          _
      $region12: #{pred_and_cld.3} parent=5 // pred_fallthru
        _
      %p177 = scmp.lt.s32.totalorder %s14, 2
      // Predicated region
      $region29: #{pred_and_cld.3} parent=5 // pred_check
        %p178 = pneg %p177
      $region30: #{pred_and_cld.3} parent=5 // pred_check_branch
        %180 = sbr.rel (%p178) target = $region32
      $region31: #{pred_and_cld.3} parent=5 // pred_region
        // Predicated region
        $region33: #{pred_and_cld.3} parent=31 // pred_check
          %p181 = pneg %p34
        $region34: #{pred_and_cld.3} parent=31 // pred_check_branch
          %183 = sbr.rel (%p181) target = $region36
        $region35: #{pred_and_cld.3} parent=31 // pred_region
          %p184 = scmp.lt.s32.totalorder %s14, 1
          %s185 = scalar_select %p184, %s14, 1
          %s186 = smul.addr %s185, 8
          %s187 = scalar_lea.vmem %s0, %s186
        $region36: #{pred_and_cld.3} parent=31 // pred_fallthru
          _
      $region32: #{pred_and_cld.3} parent=5 // pred_fallthru
        _
      %p188 = scmp.le.s32.totalorder 1, %s14
      %p189 = scmp.lt.s32.totalorder %s14, 3
      %p190 = pnand %p188, %p189
      %p191 = pneg %p190
      // Predicated region
      $region37: #{pred_and_cld.3} parent=5 // pred_check
        _
      $region38: #{pred_and_cld.3} parent=5 // pred_check_branch
        %193 = sbr.rel (%p190) target = $region40
      $region39: #{pred_and_cld.3} parent=5 // pred_region
        %s194 = ssub.s32 %s14, 1
        %p195 = scmp.lt.s32.totalorder %s19, 1
        %s196 = scalar_select %p195, %s19, 1
        %s197 = smul.addr %s196, 8
        %s198 = scalar_lea.vmem %s0, %s197
        %p199 = pneg %p40
        %p200 = pneg %p37
        %p201 = pneg %p61
        %p202 = pneg %p58
        %p203 = pneg %p82
        %p204 = pneg %p79
        %p205 = pneg %p103
        %p206 = pneg %p100
        %p207 = pneg %p124
        %p208 = pneg %p121
        %p209 = pneg %p150
        %p210 = pneg %p147
        %s211 = sand.u32 %s137, 1
        %s212 = scalar_lea.sflag [#allocation3], %s211
        %s213 = sand.u32 %s137, 1
        %s214 = smul.addr %s213, 8
        %s215 = scalar_lea.vmem [#allocation2], %s214
        %p216 = scmp.lt.s32.totalorder %s19, 1
        %s217 = scalar_select %p216, %s19, 1
        %s218 = smul.addr %s217, 8
        %s219 = scalar_lea.vmem %s0, %s218
        %v220 = vld [vmem:[%s219] sm:$0xff]
        %v221 = vld [vmem:[%s1] sm:$0x1]
        %v223 = vperm.slane %v221, 0
        %v225 = vmul.f32 %v220, %v223
        %v226 = vld [vmem:[%s2] sm:$0x1]
        %v228 = vperm.slane %v226, 0
        %v230 = vadd.f32 %v225, %v228
        %v231 = vmax.f32 %v230, 0.0
        %v232 = vld [vmem:[%s3] sm:$0xff]
        %v233 = vld [vmem:[%s3 + $0x8] sm:$0xff]
        %v234 = vld [vmem:[%s4] sm:$0x1]
        %v236 = vperm.slane %v234, 0
        %vm238 = vcmask 130048
        %v240 = vsel %vm238, %v231, 0
        %242 = vmatpush.msra.mxu0 0.0
        %243 = vmatpush.msra.mxu0 0.0
        %244 = vmatpush.msra.mxu0 0.0
        %245 = vmatpush.msra.mxu0 0.0
        %246 = vmatpush.msra.mxu0 0.0
        %247 = vmatpush.msra.mxu0 0.0
        %248 = vmatpush.msra.mxu0 0.0
        %249 = vmatpush.msra.mxu0 0.0
        %250 = vmatpush.msra.mxu0 0.0
        %251 = vmatpush.msra.mxu0 0.0
        %252 = vmatpush.msra.mxu0 0.0
        %253 = vmatpush.msra.mxu0 0.0
        %254 = vmatpush.msra.mxu0 0.0
        %255 = vmatpush.msra.mxu0 0.0
        %256 = vmatpush.msra.mxu0 %v233
        %257 = vmatpush.msra.mxu0 %v232
        %258 = vmatmul.f32.gmra.mxu0 %v240
        %v259 = vpop.f32.mrf.mxu0
        %v260 = vadd.f32 %v236, %v259
        %261 = vdwg.mxu0
        %vm262 = vcmask 261120
        %263 = vst.msk [vmem:[%s215] sm:$0xff] %vm262, %v260
        %s264 = sand.u32 %s137, 1
        %s265 = scalar_lea.sflag [#allocation3], %s264
        %s266 = sand.u32 %s137, 1
        %s267 = smul.addr %s266, 8
        %s268 = scalar_lea.vmem [#allocation2], %s267
        // Predicated region
        $region41: #{pred_and_cld.3} parent=39 // pred_check
          %p269 = pneg %p147
        $region42: #{pred_and_cld.3} parent=39 // pred_check_branch
          %271 = sbr.rel (%p269) target = $region44
        $region43: #{pred_and_cld.3} parent=39 // pred_region
          %273 = vsyncadd %s265, 0
          %s274 = smul.addr %s19, 8
          %s275 = scalar_lea.hbm %s5, %s274
          %s277 = sshll.u32 %s268, 4
          %s278 = int_to_ptr.vmem [resolvable:$true] %s277
          %s279 = sshll.u32 %s275, 4
          %s280 = int_to_ptr.hbm [resolvable:$true] %s279
          %282 = dma.vmem_to_hbm [thread:$0]  %s278, 128, %s280, %s265
        $region44: #{pred_and_cld.3} parent=39 // pred_fallthru
          _
      $region40: #{pred_and_cld.3} parent=5 // pred_fallthru
        _
      %p283 = scmp.le.s32.totalorder 2, %s14
      // Predicated region
      $region45: #{pred_and_cld.3} parent=5 // pred_check
        %p284 = pneg %p283
      $region46: #{pred_and_cld.3} parent=5 // pred_check_branch
        %286 = sbr.rel (%p284) target = $region48
      $region47: #{pred_and_cld.3} parent=5 // pred_region
        %s287 = ssub.s32 %s14, 2
        // Predicated region
        $region49: #{pred_and_cld.3} parent=47 // pred_check
          %p288 = pneg %p153
        $region50: #{pred_and_cld.3} parent=47 // pred_check_branch
          %290 = sbr.rel (%p288) target = $region52
        $region51: #{pred_and_cld.3} parent=47 // pred_region
          %s291 = sand.u32 %s138, 1
          %s292 = scalar_lea.sflag [#allocation3], %s291
          %s293 = sand.u32 %s138, 1
          %s294 = smul.addr %s293, 8
          %s295 = scalar_lea.vmem [#allocation2], %s294
          %297 = dma.done %s292, 128
        $region52: #{pred_and_cld.3} parent=47 // pred_fallthru
          _
      $region48: #{pred_and_cld.3} parent=5 // pred_fallthru
        _
    $region6: #{pred_and_cld.3} parent=1 // loop_footer
      %s18 = sadd.s32 1, %s14
    $region7: #{pred_and_cld.3} parent=1 // loop_footer_branch
      %13 = sbr.rel target = $region3
    $region8: #{pred_and_cld.3} parent=1 // loop_exit
      _
    %298 = vsyncpa [#allocation3], 1
    %s299 = scalar_lea.sflag [#allocation3], 1
    %300 = vsyncpa %s299, 1

</llo_original>
